<compile_context>
chip_gen: v6e
topology: v6e:2x2x1
jax: 0.10.0
libtpu: 0.0.40
codegen_flags: <defaults>
</compile_context>

<pallas_src>
import jax
import jax.numpy as jnp
from jax.experimental import pallas as pl
from jax.experimental.pallas import tpu as pltpu


N_OUT = 10
N_OUT_PAD = 128  # lane-dense output width (sliced back to 10 in the wrapper)


def _round_up(x, m):
    return (x + m - 1) // m * m


def fcnn_kernel(x_ref, w1_ref, b1_ref, w2_ref, b2_ref, w3_ref, b3_ref, o_ref):
    """fc1(+BN1)->relu -> fc2(+BN2)->relu -> fc3 on one [TB, d_in] batch tile."""
    # fc1 (bf16 x bf16 -> f32 accumulate) + folded BN1, dropout=identity, relu
    h1 = jnp.dot(x_ref[...], w1_ref[...], preferred_element_type=jnp.float32)
    h1 = jnp.maximum(h1 + b1_ref[...], 0.0)

    # fc2 + folded BN2, dropout=identity, relu (tiny: keep f32)
    h2 = jnp.dot(h1, w2_ref[...], preferred_element_type=jnp.float32)
    h2 = jnp.maximum(h2 + b2_ref[...], 0.0)

    # fc3, padded to 128 lane-dense output columns (bn_d3 unused in forward)
    o_ref[...] = jnp.dot(h2, w3_ref[...], preferred_element_type=jnp.float32) + b3_ref[...]


def fcnn_forward(x, prep, *, block_b=2048):
    """x: [B, 4*nf*4*4] float32. prep: BN-folded / padded params from prepare_params."""
    B, d_in = x.shape
    w1, b1 = prep["w1"], prep["b1"]
    w2, b2 = prep["w2"], prep["b2"]
    w3, b3 = prep["w3"], prep["b3"]
    d1, d2 = w1.shape[1], w2.shape[1]

    # Batch tile: multiple of 16 sublanes (bf16), capped at block_b, padded batch.
    TB = min(block_b, _round_up(B, 16))
    Bp = _round_up(B, TB)

    xb = x.astype(jnp.bfloat16)          # halve dominant HBM traffic
    if Bp != B:
        xb = jnp.pad(xb, ((0, Bp - B), (0, 0)))

    grid = (Bp // TB,)

    def const_spec(arr):
        # Same block every grid step -> stays VMEM-resident (no re-DMA).
        return pl.BlockSpec(arr.shape, lambda i: (0, 0))

    flops = 2 * Bp * (d_in * d1 + d1 * d2 + d2 * N_OUT_PAD)
    bytes_accessed = (
        xb.size * 2 + Bp * N_OUT_PAD * 4 + w1.size * 2
        + (w2.size + w3.size + b1.size + b2.size + b3.size) * 4
    )

    out = pl.pallas_call(
        fcnn_kernel,
        out_shape=jax.ShapeDtypeStruct((Bp, N_OUT_PAD), jnp.float32),
        grid=grid,
        in_specs=[
            pl.BlockSpec((TB, d_in), lambda i: (i, 0)),   # x: tiled over batch
            const_spec(w1), const_spec(b1),
            const_spec(w2), const_spec(b2),
            const_spec(w3), const_spec(b3),
        ],
        out_specs=pl.BlockSpec((TB, N_OUT_PAD), lambda i: (i, 0)),
        compiler_params=pltpu.CompilerParams(
            dimension_semantics=("parallel",),            # megacore sharding on v7x
            vmem_limit_bytes=48 * 1024 * 1024,            # headroom on v7x's 64 MiB
        ),
        cost_estimate=pl.CostEstimate(
            flops=flops, transcendentals=0, bytes_accessed=bytes_accessed),
    )(xb, w1, b1, w2, b2, w3, b3)

    return out[:B, :N_OUT]


def _linear_init(key, fan_in, fan_out):
    """PyTorch nn.Linear default init: U(-1/sqrt(fan_in), 1/sqrt(fan_in))."""
    kw, kb = jax.random.split(key)
    bound = 1.0 / jnp.sqrt(jnp.float32(fan_in))
    w = jax.random.uniform(kw, (fan_in, fan_out), jnp.float32, -bound, bound)
    b = jax.random.uniform(kb, (fan_out,), jnp.float32, -bound, bound)
    return w, b


def make_raw_params(nf, key):
    """Raw params mirroring the PyTorch module (Linear + BatchNorm1d defaults)."""
    d_in, d1, d2 = 4 * nf * 4 * 4, 4 * nf, nf
    k1, k2, k3 = jax.random.split(key, 3)
    w1, b1 = _linear_init(k1, d_in, d1)
    w2, b2 = _linear_init(k2, d1, d2)
    w3, b3 = _linear_init(k3, d2, N_OUT)
    bn1 = dict(gamma=jnp.ones((d1,)), beta=jnp.zeros((d1,)),
               mean=jnp.zeros((d1,)), var=jnp.ones((d1,)))
    bn2 = dict(gamma=jnp.ones((d2,)), beta=jnp.zeros((d2,)),
               mean=jnp.zeros((d2,)), var=jnp.ones((d2,)))
    return dict(w1=w1, b1=b1, bn1=bn1, w2=w2, b2=b2, bn2=bn2, w3=w3, b3=b3)


def prepare_params(raw, eps=1e-5):
    """Fold eval-mode BN into fc1/fc2, pad fc3 to 128 lanes, cast w1/x-path to bf16."""
    def fold(w, b, bn):
        scale = bn["gamma"] / jnp.sqrt(bn["var"] + eps)
        shift = bn["beta"] - bn["mean"] * scale
        return w * scale[None, :], b * scale + shift

    w1, b1 = fold(raw["w1"], raw["b1"], raw["bn1"])
    w2, b2 = fold(raw["w2"], raw["b2"], raw["bn2"])
    w3 = jnp.pad(raw["w3"], ((0, 0), (0, N_OUT_PAD - N_OUT)))
    b3 = jnp.pad(raw["b3"], ((0, N_OUT_PAD - N_OUT),))

    return dict(
        w1=w1.astype(jnp.bfloat16), b1=b1[None, :],
        w2=w2, b2=b2[None, :],
        w3=w3, b3=b3[None, :],
    )


def reference_forward(x, prep):
    """Pure-JAX reference with identical math (bf16 fc1, f32 fc2/fc3/epilogue)."""
    xb = x.astype(jnp.bfloat16)
    h1 = jnp.maximum(
        jnp.dot(xb, prep["w1"], preferred_element_type=jnp.float32) + prep["b1"], 0.0)
    h2 = jnp.maximum(
        jnp.dot(h1, prep["w2"], preferred_element_type=jnp.float32) + prep["b2"], 0.0)
    out = jnp.dot(h2, prep["w3"], preferred_element_type=jnp.float32) + prep["b3"]
    return out[:, :N_OUT]


if __name__ == "__main__":
    nf = 8          # fc1 in = 4*nf*4*4 = 512, hidden = 32 -> 8, out = 10
    B = 8           # small batch (padded to the 16-row bf16 tile internally)

    key = jax.random.PRNGKey(0)
    k_params, k_x = jax.random.split(key)

    raw = make_raw_params(nf, k_params)
    prep = prepare_params(raw)
    x = jax.random.normal(k_x, (B, 4 * nf * 4 * 4), jnp.float32)

    out = fcnn_forward(x, prep)
    out = jax.block_until_ready(out)

    ref = reference_forward(x, prep)
    assert out.shape == (B, N_OUT), out.shape
    assert jnp.allclose(out, ref, atol=2e-3, rtol=2e-3), "mismatch vs reference"

    print("KERNEL_OK")
</pallas_src>

<mosaic_0001>
module attributes {stable_mosaic.version = 11 : i64} {
  func.func @fcnn_kernel(%arg0: i32, %arg1: memref<16x512xbf16, #tpu.memory_space<vmem>>, %arg2: memref<512x32xbf16, #tpu.memory_space<vmem>>, %arg3: memref<1x32xf32, #tpu.memory_space<vmem>>, %arg4: memref<32x8xf32, #tpu.memory_space<vmem>>, %arg5: memref<1x8xf32, #tpu.memory_space<vmem>>, %arg6: memref<8x128xf32, #tpu.memory_space<vmem>>, %arg7: memref<1x128xf32, #tpu.memory_space<vmem>>, %arg8: memref<16x128xf32, #tpu.memory_space<vmem>>) attributes {dimension_semantics = [#tpu.dimension_semantics<parallel>], iteration_bounds = array<i64: 1>, scalar_prefetch = 0 : i64, scratch_operands = 0 : i64, tpu.core_type = #tpu.core_type<tc>, window_params = [{transform_indices = @transform_0, window_bounds = array<i64: 16, 512>}, {pipeline_mode = #tpu.pipeline_mode<synchronous>, transform_indices = @transform_1, window_bounds = array<i64: 512, 32>}, {pipeline_mode = #tpu.pipeline_mode<synchronous>, transform_indices = @transform_2, window_bounds = array<i64: 1, 32>}, {pipeline_mode = #tpu.pipeline_mode<synchronous>, transform_indices = @transform_3, window_bounds = array<i64: 32, 8>}, {pipeline_mode = #tpu.pipeline_mode<synchronous>, transform_indices = @transform_4, window_bounds = array<i64: 1, 8>}, {pipeline_mode = #tpu.pipeline_mode<synchronous>, transform_indices = @transform_5, window_bounds = array<i64: 8, 128>}, {pipeline_mode = #tpu.pipeline_mode<synchronous>, transform_indices = @transform_6, window_bounds = array<i64: 1, 128>}, {transform_indices = @transform_7, window_bounds = array<i64: 16, 128>}]} {
    %c0 = arith.constant 0 : index
    %c0_0 = arith.constant 0 : index
    %0 = vector.load %arg1[%c0, %c0_0] : memref<16x512xbf16, #tpu.memory_space<vmem>>, vector<16x512xbf16>
    %c0_1 = arith.constant 0 : index
    %c0_2 = arith.constant 0 : index
    %1 = vector.load %arg2[%c0_1, %c0_2] : memref<512x32xbf16, #tpu.memory_space<vmem>>, vector<512x32xbf16>
    %cst = arith.constant dense<0.000000e+00> : vector<16x32xf32>
    %2 = tpu.matmul %0, %1, %cst {dimension_numbers = #tpu.dot_dimension_numbers<[1], [0], [0], [1], [0, 0, 1, 1], [], []>} : vector<16x512xbf16>, vector<512x32xbf16>, vector<16x32xf32> -> vector<16x32xf32>
    %c0_3 = arith.constant 0 : index
    %c0_4 = arith.constant 0 : index
    %3 = vector.load %arg3[%c0_3, %c0_4] : memref<1x32xf32, #tpu.memory_space<vmem>>, vector<1x32xf32>
    %4 = vector.broadcast %3 : vector<1x32xf32> to vector<16x32xf32>
    %5 = arith.addf %2, %4 : vector<16x32xf32>
    %cst_5 = arith.constant 0.000000e+00 : f32
    %6 = vector.broadcast %cst_5 : f32 to vector<16x32xf32>
    %7 = arith.maximumf %5, %6 : vector<16x32xf32>
    %c0_6 = arith.constant 0 : index
    %c0_7 = arith.constant 0 : index
    %8 = vector.load %arg4[%c0_6, %c0_7] : memref<32x8xf32, #tpu.memory_space<vmem>>, vector<32x8xf32>
    %cst_8 = arith.constant dense<0.000000e+00> : vector<16x8xf32>
    %9 = tpu.matmul %7, %8, %cst_8 {dimension_numbers = #tpu.dot_dimension_numbers<[1], [0], [0], [1], [0, 0, 1, 1], [], []>} : vector<16x32xf32>, vector<32x8xf32>, vector<16x8xf32> -> vector<16x8xf32>
    %c0_9 = arith.constant 0 : index
    %c0_10 = arith.constant 0 : index
    %10 = vector.load %arg5[%c0_9, %c0_10] : memref<1x8xf32, #tpu.memory_space<vmem>>, vector<1x8xf32>
    %11 = vector.broadcast %10 : vector<1x8xf32> to vector<16x8xf32>
    %12 = arith.addf %9, %11 : vector<16x8xf32>
    %cst_11 = arith.constant 0.000000e+00 : f32
    %13 = vector.broadcast %cst_11 : f32 to vector<16x8xf32>
    %14 = arith.maximumf %12, %13 : vector<16x8xf32>
    %c0_12 = arith.constant 0 : index
    %c0_13 = arith.constant 0 : index
    %15 = vector.load %arg6[%c0_12, %c0_13] : memref<8x128xf32, #tpu.memory_space<vmem>>, vector<8x128xf32>
    %cst_14 = arith.constant dense<0.000000e+00> : vector<16x128xf32>
    %16 = tpu.matmul %14, %15, %cst_14 {dimension_numbers = #tpu.dot_dimension_numbers<[1], [0], [0], [1], [0, 0, 1, 1], [], []>} : vector<16x8xf32>, vector<8x128xf32>, vector<16x128xf32> -> vector<16x128xf32>
    %c0_15 = arith.constant 0 : index
    %c0_16 = arith.constant 0 : index
    %17 = vector.load %arg7[%c0_15, %c0_16] : memref<1x128xf32, #tpu.memory_space<vmem>>, vector<1x128xf32>
    %18 = vector.broadcast %17 : vector<1x128xf32> to vector<16x128xf32>
    %19 = arith.addf %16, %18 : vector<16x128xf32>
    %c0_17 = arith.constant 0 : index
    %c0_18 = arith.constant 0 : index
    %20 = vector.load %arg8[%c0_17, %c0_18] : memref<16x128xf32, #tpu.memory_space<vmem>>, vector<16x128xf32>
    tpu.vector_store %arg8[%c0_17, %c0_18], %19 {strides = array<i32>} : memref<16x128xf32, #tpu.memory_space<vmem>>, vector<16x128xf32>,
    return
  }
  func.func @transform_0(%arg0: i32) -> (i32, i32) {
    %c0_i32 = arith.constant 0 : i32
    %c0_i32_0 = arith.constant 0 : i32
    return %arg0, %c0_i32 : i32, i32
  }
  func.func @transform_1(%arg0: i32) -> (i32, i32) {
    %c0_i32 = arith.constant 0 : i32
    %c0_i32_0 = arith.constant 0 : i32
    %c0_i32_1 = arith.constant 0 : i32
    return %c0_i32, %c0_i32_0 : i32, i32
  }
  func.func @transform_2(%arg0: i32) -> (i32, i32) {
    %c0_i32 = arith.constant 0 : i32
    %c0_i32_0 = arith.constant 0 : i32
    %c0_i32_1 = arith.constant 0 : i32
    return %c0_i32, %c0_i32_0 : i32, i32
  }
  func.func @transform_3(%arg0: i32) -> (i32, i32) {
    %c0_i32 = arith.constant 0 : i32
    %c0_i32_0 = arith.constant 0 : i32
    %c0_i32_1 = arith.constant 0 : i32
    return %c0_i32, %c0_i32_0 : i32, i32
  }
  func.func @transform_4(%arg0: i32) -> (i32, i32) {
    %c0_i32 = arith.constant 0 : i32
    %c0_i32_0 = arith.constant 0 : i32
    %c0_i32_1 = arith.constant 0 : i32
    return %c0_i32, %c0_i32_0 : i32, i32
  }
  func.func @transform_5(%arg0: i32) -> (i32, i32) {
    %c0_i32 = arith.constant 0 : i32
    %c0_i32_0 = arith.constant 0 : i32
    %c0_i32_1 = arith.constant 0 : i32
    return %c0_i32, %c0_i32_0 : i32, i32
  }
  func.func @transform_6(%arg0: i32) -> (i32, i32) {
    %c0_i32 = arith.constant 0 : i32
    %c0_i32_0 = arith.constant 0 : i32
    %c0_i32_1 = arith.constant 0 : i32
    return %c0_i32, %c0_i32_0 : i32, i32
  }
  func.func @transform_7(%arg0: i32) -> (i32, i32) {
    %c0_i32 = arith.constant 0 : i32
    %c0_i32_0 = arith.constant 0 : i32
    return %arg0, %c0_i32 : i32, i32
  }
}

</mosaic_0001>

<llo_original>
// kernel: tpu_custom_call.1
$region0: #{tpu_custom_call.1}
  #allocation0 [shape = 'u32[]', space=smem, size = 0x4, offset = 0x4, fixed_abs, tag = 'smem constant byte address 0x4 - core index']
  #allocation1 [shape = 'u32[144,128]{1,0:T(1,128)}', space=vmem, size = 0x12000, scoped, tag = 'internal scratch']
  %s0 = inlined_call_operand.vmem [shape: bf16[16,512], index: 0, kind: input, shape index: {}]
  %s1 = inlined_call_operand.vmem [shape: bf16[512,32], index: 1, kind: input, shape index: {}]
  %s2 = inlined_call_operand.vmem [shape: f32[1,32], index: 2, kind: input, shape index: {}]
  %s3 = inlined_call_operand.vmem [shape: f32[32,8], index: 3, kind: input, shape index: {}]
  %s4 = inlined_call_operand.vmem [shape: f32[1,8], index: 4, kind: input, shape index: {}]
  %s5 = inlined_call_operand.vmem [shape: f32[8,128], index: 5, kind: input, shape index: {}]
  %s6 = inlined_call_operand.vmem [shape: f32[1,128], index: 6, kind: input, shape index: {}]
  %s7 = inlined_call_operand.hbm [shape: f32[16,128], index: 7, kind: output, shape index: {}]
  %s8 = sld [smem:[#allocation0]]
  $region38: #{tpu_custom_call.1} parent=0
    _
  %s10 = ssub.s32 1, %s8
  %s11 = scalar_select 0, %s10, %s8
  $region1: #{tpu_custom_call.1} parent=0
    #allocation2 [shape = 'u8[8192]{0}', space=vmem, size = 0x2000, scoped, tag = 'output window, operand 0, single buffered']
    #allocation3 [shape = 's32[1]{0}', space=sflag, size = 0x4, scoped, tag = 'scoped memory for tpu_custom_call.1']
    %12 = vsyncpa [#allocation3], 0
    // Predicated region
    $region2: #{tpu_custom_call.1} parent=1 // pred_check
      _
    $region3: #{tpu_custom_call.1} parent=1 // pred_check_branch
      %14 = sbr.rel (0) target = $region5
    $region4: #{tpu_custom_call.1} parent=1 // pred_region
      _
    $region5: #{tpu_custom_call.1} parent=1 // pred_fallthru
      _
    // Predicated region
    $region6: #{tpu_custom_call.1} parent=1 // pred_check
      _
    $region7: #{tpu_custom_call.1} parent=1 // pred_check_branch
      %16 = sbr.rel (0) target = $region9
    $region8: #{tpu_custom_call.1} parent=1 // pred_region
      _
    $region9: #{tpu_custom_call.1} parent=1 // pred_fallthru
      _
    // Predicated region
    $region10: #{tpu_custom_call.1} parent=1 // pred_check
      _
    $region11: #{tpu_custom_call.1} parent=1 // pred_check_branch
      %18 = sbr.rel (0) target = $region13
    $region12: #{tpu_custom_call.1} parent=1 // pred_region
      _
    $region13: #{tpu_custom_call.1} parent=1 // pred_fallthru
      _
    // Predicated region
    $region14: #{tpu_custom_call.1} parent=1 // pred_check
      _
    $region15: #{tpu_custom_call.1} parent=1 // pred_check_branch
      %20 = sbr.rel (0) target = $region17
    $region16: #{tpu_custom_call.1} parent=1 // pred_region
      _
    $region17: #{tpu_custom_call.1} parent=1 // pred_fallthru
      _
    // Predicated region
    $region18: #{tpu_custom_call.1} parent=1 // pred_check
      _
    $region19: #{tpu_custom_call.1} parent=1 // pred_check_branch
      %22 = sbr.rel (0) target = $region21
    $region20: #{tpu_custom_call.1} parent=1 // pred_region
      _
    $region21: #{tpu_custom_call.1} parent=1 // pred_fallthru
      _
    // Predicated region
    $region22: #{tpu_custom_call.1} parent=1 // pred_check
      _
    $region23: #{tpu_custom_call.1} parent=1 // pred_check_branch
      %24 = sbr.rel (0) target = $region25
    $region24: #{tpu_custom_call.1} parent=1 // pred_region
      _
    $region25: #{tpu_custom_call.1} parent=1 // pred_fallthru
      _
    // Predicated region
    $region26: #{tpu_custom_call.1} parent=1 // pred_check
      _
    $region27: #{tpu_custom_call.1} parent=1 // pred_check_branch
      %26 = sbr.rel (0) target = $region29
    $region28: #{tpu_custom_call.1} parent=1 // pred_region
      _
    $region29: #{tpu_custom_call.1} parent=1 // pred_fallthru
      _
    %v28 = vld [vmem:[%s0] sm:$0xff]
    %v29 = vld [vmem:[%s0 + $0x8] sm:$0xff]
    %v30 = vld [vmem:[%s0 + $0x10] sm:$0xff]
    %v31 = vld [vmem:[%s0 + $0x18] sm:$0xff]
    %v32 = vld [vmem:[%s1] sm:$0xf]
    %v33 = vld [vmem:[%s1 + $0x4] sm:$0xf]
    %v34 = vld [vmem:[%s1 + $0x8] sm:$0xf]
    %v35 = vld [vmem:[%s1 + $0xc] sm:$0xf]
    %v36 = vld [vmem:[%s1 + $0x10] sm:$0xf]
    %v37 = vld [vmem:[%s1 + $0x14] sm:$0xf]
    %v38 = vld [vmem:[%s1 + $0x18] sm:$0xf]
    %v39 = vld [vmem:[%s1 + $0x1c] sm:$0xf]
    %v40 = vld [vmem:[%s1 + $0x20] sm:$0xf]
    %v41 = vld [vmem:[%s1 + $0x24] sm:$0xf]
    %v42 = vld [vmem:[%s1 + $0x28] sm:$0xf]
    %v43 = vld [vmem:[%s1 + $0x2c] sm:$0xf]
    %v44 = vld [vmem:[%s1 + $0x30] sm:$0xf]
    %v45 = vld [vmem:[%s1 + $0x34] sm:$0xf]
    %v46 = vld [vmem:[%s1 + $0x38] sm:$0xf]
    %v47 = vld [vmem:[%s1 + $0x3c] sm:$0xf]
    %v48 = vld [vmem:[%s1 + $0x40] sm:$0xf]
    %v49 = vld [vmem:[%s1 + $0x44] sm:$0xf]
    %v50 = vld [vmem:[%s1 + $0x48] sm:$0xf]
    %v51 = vld [vmem:[%s1 + $0x4c] sm:$0xf]
    %v52 = vld [vmem:[%s1 + $0x50] sm:$0xf]
    %v53 = vld [vmem:[%s1 + $0x54] sm:$0xf]
    %v54 = vld [vmem:[%s1 + $0x58] sm:$0xf]
    %v55 = vld [vmem:[%s1 + $0x5c] sm:$0xf]
    %v56 = vld [vmem:[%s1 + $0x60] sm:$0xf]
    %v57 = vld [vmem:[%s1 + $0x64] sm:$0xf]
    %v58 = vld [vmem:[%s1 + $0x68] sm:$0xf]
    %v59 = vld [vmem:[%s1 + $0x6c] sm:$0xf]
    %v60 = vld [vmem:[%s1 + $0x70] sm:$0xf]
    %v61 = vld [vmem:[%s1 + $0x74] sm:$0xf]
    %v62 = vld [vmem:[%s1 + $0x78] sm:$0xf]
    %v63 = vld [vmem:[%s1 + $0x7c] sm:$0xf]
    %v64 = vld [vmem:[%s1 + $0x80] sm:$0xf]
    %v65 = vld [vmem:[%s1 + $0x84] sm:$0xf]
    %v66 = vld [vmem:[%s1 + $0x88] sm:$0xf]
    %v67 = vld [vmem:[%s1 + $0x8c] sm:$0xf]
    %v68 = vld [vmem:[%s1 + $0x90] sm:$0xf]
    %v69 = vld [vmem:[%s1 + $0x94] sm:$0xf]
    %v70 = vld [vmem:[%s1 + $0x98] sm:$0xf]
    %v71 = vld [vmem:[%s1 + $0x9c] sm:$0xf]
    %v72 = vld [vmem:[%s1 + $0xa0] sm:$0xf]
    %v73 = vld [vmem:[%s1 + $0xa4] sm:$0xf]
    %v74 = vld [vmem:[%s1 + $0xa8] sm:$0xf]
    %v75 = vld [vmem:[%s1 + $0xac] sm:$0xf]
    %v76 = vld [vmem:[%s1 + $0xb0] sm:$0xf]
    %v77 = vld [vmem:[%s1 + $0xb4] sm:$0xf]
    %v78 = vld [vmem:[%s1 + $0xb8] sm:$0xf]
    %v79 = vld [vmem:[%s1 + $0xbc] sm:$0xf]
    %v80 = vld [vmem:[%s1 + $0xc0] sm:$0xf]
    %v81 = vld [vmem:[%s1 + $0xc4] sm:$0xf]
    %v82 = vld [vmem:[%s1 + $0xc8] sm:$0xf]
    %v83 = vld [vmem:[%s1 + $0xcc] sm:$0xf]
    %v84 = vld [vmem:[%s1 + $0xd0] sm:$0xf]
    %v85 = vld [vmem:[%s1 + $0xd4] sm:$0xf]
    %v86 = vld [vmem:[%s1 + $0xd8] sm:$0xf]
    %v87 = vld [vmem:[%s1 + $0xdc] sm:$0xf]
    %v88 = vld [vmem:[%s1 + $0xe0] sm:$0xf]
    %v89 = vld [vmem:[%s1 + $0xe4] sm:$0xf]
    %v90 = vld [vmem:[%s1 + $0xe8] sm:$0xf]
    %v91 = vld [vmem:[%s1 + $0xec] sm:$0xf]
    %v92 = vld [vmem:[%s1 + $0xf0] sm:$0xf]
    %v93 = vld [vmem:[%s1 + $0xf4] sm:$0xf]
    %v94 = vld [vmem:[%s1 + $0xf8] sm:$0xf]
    %v95 = vld [vmem:[%s1 + $0xfc] sm:$0xf]
    %v96 = vld [vmem:[%s2] sm:$0x1]
    %v98 = vlaneseq
    %v99 = vshrl.u32 %v98, 7
    %v100 = vsub.s32 0, %v99
    %v101 = vrot.slane %v96, %v100
    %v107 = vunpack.c.l.b16 %v28
    %v108 = vunpack.c.h.b16 %v28
    %v109 = vunpack.c.l.b16 %v29
    %v110 = vunpack.c.h.b16 %v29
    %v111 = vunpack.c.l.b16 %v30
    %v112 = vunpack.c.h.b16 %v30
    %v113 = vunpack.c.l.b16 %v31
    %v114 = vunpack.c.h.b16 %v31
    %v115 = vpack.c.b16 %v111, %v107
    %v116 = vpack.c.b16 %v112, %v108
    %v117 = vpack.c.b16 %v113, %v109
    %v118 = vpack.c.b16 %v114, %v110
    %v187 = vunpack.c.l.b16 %v32
    %v188 = vunpack.c.l.b16 %v33
    %v189 = vunpack.c.l.b16 %v34
    %v190 = vunpack.c.l.b16 %v35
    %v191 = vunpack.c.l.b16 %v36
    %v192 = vunpack.c.l.b16 %v37
    %v193 = vunpack.c.l.b16 %v38
    %v194 = vunpack.c.l.b16 %v39
    %v195 = vunpack.c.l.b16 %v40
    %v196 = vunpack.c.l.b16 %v41
    %v197 = vunpack.c.l.b16 %v42
    %v198 = vunpack.c.l.b16 %v43
    %v199 = vunpack.c.l.b16 %v44
    %v200 = vunpack.c.l.b16 %v45
    %v201 = vunpack.c.l.b16 %v46
    %v202 = vunpack.c.l.b16 %v47
    %v203 = vunpack.c.l.b16 %v48
    %v204 = vunpack.c.l.b16 %v49
    %v205 = vunpack.c.l.b16 %v50
    %v206 = vunpack.c.l.b16 %v51
    %v207 = vunpack.c.l.b16 %v52
    %v208 = vunpack.c.l.b16 %v53
    %v209 = vunpack.c.l.b16 %v54
    %v210 = vunpack.c.l.b16 %v55
    %v211 = vunpack.c.l.b16 %v56
    %v212 = vunpack.c.l.b16 %v57
    %v213 = vunpack.c.l.b16 %v58
    %v214 = vunpack.c.l.b16 %v59
    %v215 = vunpack.c.l.b16 %v60
    %v216 = vunpack.c.l.b16 %v61
    %v217 = vunpack.c.l.b16 %v62
    %v218 = vunpack.c.l.b16 %v63
    %v219 = vunpack.c.l.b16 %v64
    %v220 = vunpack.c.l.b16 %v65
    %v221 = vunpack.c.l.b16 %v66
    %v222 = vunpack.c.l.b16 %v67
    %v223 = vunpack.c.l.b16 %v68
    %v224 = vunpack.c.l.b16 %v69
    %v225 = vunpack.c.l.b16 %v70
    %v226 = vunpack.c.l.b16 %v71
    %v227 = vunpack.c.l.b16 %v72
    %v228 = vunpack.c.l.b16 %v73
    %v229 = vunpack.c.l.b16 %v74
    %v230 = vunpack.c.l.b16 %v75
    %v231 = vunpack.c.l.b16 %v76
    %v232 = vunpack.c.l.b16 %v77
    %v233 = vunpack.c.l.b16 %v78
    %v234 = vunpack.c.l.b16 %v79
    %v235 = vunpack.c.l.b16 %v80
    %v236 = vunpack.c.l.b16 %v81
    %v237 = vunpack.c.l.b16 %v82
    %v238 = vunpack.c.l.b16 %v83
    %v239 = vunpack.c.l.b16 %v84
    %v240 = vunpack.c.l.b16 %v85
    %v241 = vunpack.c.l.b16 %v86
    %v242 = vunpack.c.l.b16 %v87
    %v243 = vunpack.c.l.b16 %v88
    %v244 = vunpack.c.l.b16 %v89
    %v245 = vunpack.c.l.b16 %v90
    %v246 = vunpack.c.l.b16 %v91
    %v247 = vunpack.c.l.b16 %v92
    %v248 = vunpack.c.l.b16 %v93
    %v249 = vunpack.c.l.b16 %v94
    %v250 = vunpack.c.l.b16 %v95
    %v251 = vpack.c.b16 %v188, %v187
    %v252 = vpack.c.b16 %v190, %v189
    %v253 = vpack.c.b16 %v192, %v191
    %v254 = vpack.c.b16 %v194, %v193
    %v255 = vpack.c.b16 %v196, %v195
    %v256 = vpack.c.b16 %v198, %v197
    %v257 = vpack.c.b16 %v200, %v199
    %v258 = vpack.c.b16 %v202, %v201
    %v259 = vpack.c.b16 %v204, %v203
    %v260 = vpack.c.b16 %v206, %v205
    %v261 = vpack.c.b16 %v208, %v207
    %v262 = vpack.c.b16 %v210, %v209
    %v263 = vpack.c.b16 %v212, %v211
    %v264 = vpack.c.b16 %v214, %v213
    %v265 = vpack.c.b16 %v216, %v215
    %v266 = vpack.c.b16 %v218, %v217
    %v267 = vpack.c.b16 %v220, %v219
    %v268 = vpack.c.b16 %v222, %v221
    %v269 = vpack.c.b16 %v224, %v223
    %v270 = vpack.c.b16 %v226, %v225
    %v271 = vpack.c.b16 %v228, %v227
    %v272 = vpack.c.b16 %v230, %v229
    %v273 = vpack.c.b16 %v232, %v231
    %v274 = vpack.c.b16 %v234, %v233
    %v275 = vpack.c.b16 %v236, %v235
    %v276 = vpack.c.b16 %v238, %v237
    %v277 = vpack.c.b16 %v240, %v239
    %v278 = vpack.c.b16 %v242, %v241
    %v279 = vpack.c.b16 %v244, %v243
    %v280 = vpack.c.b16 %v246, %v245
    %v281 = vpack.c.b16 %v248, %v247
    %v282 = vpack.c.b16 %v250, %v249
    %315 = vmatprep.subr.bf16.mxu0 0
    %316 = vmatpush1.bf16.msra.mxu0 %v258
    %317 = vmatprep.subr.bf16.mxu0 0
    %318 = vmatpush1.bf16.msra.mxu0 %v257
    %319 = vmatprep.subr.bf16.mxu0 0
    %320 = vmatpush1.bf16.msra.mxu0 %v256
    %321 = vmatprep.subr.bf16.mxu0 0
    %322 = vmatpush1.bf16.msra.mxu0 %v255
    %323 = vmatprep.subr.bf16.mxu0 0
    %324 = vmatpush1.bf16.msra.mxu0 %v254
    %325 = vmatprep.subr.bf16.mxu0 0
    %326 = vmatpush1.bf16.msra.mxu0 %v253
    %327 = vmatprep.subr.bf16.mxu0 0
    %328 = vmatpush1.bf16.msra.mxu0 %v252
    %329 = vmatprep.subr.bf16.mxu0 0
    %330 = vmatpush1.bf16.msra.mxu0 %v251
    %331 = vmatprep.subr.bf16.mxu0 0
    %332 = vmatpush2.bf16.msra.mxu0 %v266
    %333 = vmatprep.subr.bf16.mxu0 0
    %334 = vmatpush2.bf16.msra.mxu0 %v265
    %335 = vmatprep.subr.bf16.mxu0 0
    %336 = vmatpush2.bf16.msra.mxu0 %v264
    %337 = vmatprep.subr.bf16.mxu0 0
    %338 = vmatpush2.bf16.msra.mxu0 %v263
    %339 = vmatprep.subr.bf16.mxu0 0
    %340 = vmatpush2.bf16.msra.mxu0 %v262
    %341 = vmatprep.subr.bf16.mxu0 0
    %342 = vmatpush2.bf16.msra.mxu0 %v261
    %343 = vmatprep.subr.bf16.mxu0 0
    %344 = vmatpush2.bf16.msra.mxu0 %v260
    %345 = vmatprep.subr.bf16.mxu0 0
    %346 = vmatpush2.bf16.msra.mxu0 %v259
    %347 = vmatprep.mubr.bf16.mxu0 %v116
    %348 = vmatmul.mubr.bf16.gmra.mxu0 %v115
    %v349 = vpop.f32.mrf.mxu0
    %v350 = vadd.f32 %v101, %v349
    %v351 = vpop.f32.mrf.mxu0
    %v352 = vpop.f32.mrf.mxu0
    %v353 = vadd.f32 %v101, %v352
    %v354 = vpop.f32.mrf.mxu0
    %355 = vdwg.mxu0
    %356 = vmatprep.subr.bf16.mxu0 0
    %357 = vmatpush1.bf16.msra.mxu0 %v274
    %358 = vmatprep.subr.bf16.mxu0 0
    %359 = vmatpush1.bf16.msra.mxu0 %v273
    %360 = vmatprep.subr.bf16.mxu0 0
    %361 = vmatpush1.bf16.msra.mxu0 %v272
    %362 = vmatprep.subr.bf16.mxu0 0
    %363 = vmatpush1.bf16.msra.mxu0 %v271
    %364 = vmatprep.subr.bf16.mxu0 0
    %365 = vmatpush1.bf16.msra.mxu0 %v270
    %366 = vmatprep.subr.bf16.mxu0 0
    %367 = vmatpush1.bf16.msra.mxu0 %v269
    %368 = vmatprep.subr.bf16.mxu0 0
    %369 = vmatpush1.bf16.msra.mxu0 %v268
    %370 = vmatprep.subr.bf16.mxu0 0
    %371 = vmatpush1.bf16.msra.mxu0 %v267
    %372 = vmatprep.subr.bf16.mxu0 0
    %373 = vmatpush2.bf16.msra.mxu0 %v282
    %374 = vmatprep.subr.bf16.mxu0 0
    %375 = vmatpush2.bf16.msra.mxu0 %v281
    %376 = vmatprep.subr.bf16.mxu0 0
    %377 = vmatpush2.bf16.msra.mxu0 %v280
    %378 = vmatprep.subr.bf16.mxu0 0
    %379 = vmatpush2.bf16.msra.mxu0 %v279
    %380 = vmatprep.subr.bf16.mxu0 0
    %381 = vmatpush2.bf16.msra.mxu0 %v278
    %382 = vmatprep.subr.bf16.mxu0 0
    %383 = vmatpush2.bf16.msra.mxu0 %v277
    %384 = vmatprep.subr.bf16.mxu0 0
    %385 = vmatpush2.bf16.msra.mxu0 %v276
    %386 = vmatprep.subr.bf16.mxu0 0
    %387 = vmatpush2.bf16.msra.mxu0 %v275
    %388 = vmatprep.mubr.bf16.mxu0 %v118
    %389 = vmatmul.mubr.bf16.gmra.mxu0 %v117
    %v390 = vpop.f32.mrf.mxu0
    %v391 = vadd.f32 %v350, %v390
    %v392 = vpop.f32.mrf.mxu0
    %v393 = vpop.f32.mrf.mxu0
    %v394 = vadd.f32 %v353, %v393
    %v395 = vpop.f32.mrf.mxu0
    %396 = vdwg.mxu0
    %v397 = vmax.f32 %v391, 0.0
    %v398 = vmax.f32 %v394, 0.0
    %v399 = vld [vmem:[%s3] sm:$0xff]
    %v400 = vld [vmem:[%s3 + $0x8] sm:$0xff]
    %v401 = vld [vmem:[%s3 + $0x10] sm:$0xff]
    %v402 = vld [vmem:[%s3 + $0x18] sm:$0xff]
    %v403 = vld [vmem:[%s4] sm:$0x1]
    %v405 = vlaneseq
    %v406 = vshrl.u32 %v405, 7
    %v407 = vsub.s32 0, %v406
    %v408 = vrot.slane %v403, %v407
    %vm410 = vcmask 261120
    %v412 = vsel %vm410, %v397, 0
    %v415 = vsel %vm410, %v398, 0
    %417 = vmatprep.subr.mxu0 0.0
    %418 = vmatpush1.msra.mxu0 0.0
    %419 = vmatprep.subr.mxu0 0.0
    %420 = vmatpush1.msra.mxu0 0.0
    %421 = vmatprep.subr.mxu0 0.0
    %422 = vmatpush1.msra.mxu0 0.0
    %423 = vmatprep.subr.mxu0 0.0
    %424 = vmatpush1.msra.mxu0 0.0
    %425 = vmatprep.subr.mxu0 0.0
    %426 = vmatpush1.msra.mxu0 0.0
    %427 = vmatprep.subr.mxu0 0.0
    %428 = vmatpush1.msra.mxu0 0.0
    %429 = vmatprep.subr.mxu0 0.0
    %430 = vmatpush1.msra.mxu0 0.0
    %431 = vmatprep.subr.mxu0 0.0
    %432 = vmatpush1.msra.mxu0 0.0
    %433 = vmatprep.subr.mxu0 0.0
    %434 = vmatpush1.msra.mxu0 0.0
    %435 = vmatprep.subr.mxu0 0.0
    %436 = vmatpush1.msra.mxu0 0.0
    %437 = vmatprep.subr.mxu0 0.0
    %438 = vmatpush1.msra.mxu0 0.0
    %439 = vmatprep.subr.mxu0 0.0
    %440 = vmatpush1.msra.mxu0 0.0
    %441 = vmatprep.subr.mxu0 0.0
    %442 = vmatpush1.msra.mxu0 %v402
    %443 = vmatprep.subr.mxu0 0.0
    %444 = vmatpush1.msra.mxu0 %v401
    %445 = vmatprep.subr.mxu0 0.0
    %446 = vmatpush1.msra.mxu0 %v400
    %447 = vmatprep.subr.mxu0 0.0
    %448 = vmatpush1.msra.mxu0 %v399
    %449 = vmatprep.subr.mxu0 0.0
    %450 = vmatpush2.msra.mxu0 0.0
    %451 = vmatprep.subr.mxu0 0.0
    %452 = vmatpush2.msra.mxu0 0.0
    %453 = vmatprep.subr.mxu0 0.0
    %454 = vmatpush2.msra.mxu0 0.0
    %455 = vmatprep.subr.mxu0 0.0
    %456 = vmatpush2.msra.mxu0 0.0
    %457 = vmatprep.subr.mxu0 0.0
    %458 = vmatpush2.msra.mxu0 0.0
    %459 = vmatprep.subr.mxu0 0.0
    %460 = vmatpush2.msra.mxu0 0.0
    %461 = vmatprep.subr.mxu0 0.0
    %462 = vmatpush2.msra.mxu0 0.0
    %463 = vmatprep.subr.mxu0 0.0
    %464 = vmatpush2.msra.mxu0 0.0
    %465 = vmatprep.subr.mxu0 0.0
    %466 = vmatpush2.msra.mxu0 0.0
    %467 = vmatprep.subr.mxu0 0.0
    %468 = vmatpush2.msra.mxu0 0.0
    %469 = vmatprep.subr.mxu0 0.0
    %470 = vmatpush2.msra.mxu0 0.0
    %471 = vmatprep.subr.mxu0 0.0
    %472 = vmatpush2.msra.mxu0 0.0
    %473 = vmatprep.subr.mxu0 0.0
    %474 = vmatpush2.msra.mxu0 0.0
    %475 = vmatprep.subr.mxu0 0.0
    %476 = vmatpush2.msra.mxu0 0.0
    %477 = vmatprep.subr.mxu0 0.0
    %478 = vmatpush2.msra.mxu0 0.0
    %479 = vmatprep.subr.mxu0 0.0
    %480 = vmatpush2.msra.mxu0 0.0
    %481 = vmatprep.mubr.f32.mxu0 0.0
    %482 = vmatmul.mubr.f32.gmra.mxu0 %v412
    %v483 = vpop.f32.mrf.mxu0
    %v484 = vadd.f32 %v408, %v483
    %v485 = vpop.f32.mrf.mxu0
    %486 = vmatprep.mubr.f32.mxu0 0.0
    %487 = vmatmul.mubr.f32.gmra.mxu0 %v415
    %v488 = vpop.f32.mrf.mxu0
    %v489 = vadd.f32 %v408, %v488
    %v490 = vpop.f32.mrf.mxu0
    %491 = vdwg.mxu0
    %v492 = vmax.f32 %v484, 0.0
    %v493 = vmax.f32 %v489, 0.0
    %v494 = vld [vmem:[%s5] sm:$0xff]
    %v495 = vld [vmem:[%s6] sm:$0x1]
    %v497 = vlaneseq
    %v498 = vshrl.u32 %v497, 7
    %v499 = vsub.s32 0, %v498
    %v500 = vrot.slane %v495, %v499
    %vm502 = vcmask 64512
    %v504 = vsel %vm502, %v492, 0
    %v507 = vsel %vm502, %v493, 0
    %509 = vmatprep.subr.mxu0 0.0
    %510 = vmatpush1.msra.mxu0 0.0
    %511 = vmatprep.subr.mxu0 0.0
    %512 = vmatpush1.msra.mxu0 0.0
    %513 = vmatprep.subr.mxu0 0.0
    %514 = vmatpush1.msra.mxu0 0.0
    %515 = vmatprep.subr.mxu0 0.0
    %516 = vmatpush1.msra.mxu0 0.0
    %517 = vmatprep.subr.mxu0 0.0
    %518 = vmatpush1.msra.mxu0 0.0
    %519 = vmatprep.subr.mxu0 0.0
    %520 = vmatpush1.msra.mxu0 0.0
    %521 = vmatprep.subr.mxu0 0.0
    %522 = vmatpush1.msra.mxu0 0.0
    %523 = vmatprep.subr.mxu0 0.0
    %524 = vmatpush1.msra.mxu0 0.0
    %525 = vmatprep.subr.mxu0 0.0
    %526 = vmatpush1.msra.mxu0 0.0
    %527 = vmatprep.subr.mxu0 0.0
    %528 = vmatpush1.msra.mxu0 0.0
    %529 = vmatprep.subr.mxu0 0.0
    %530 = vmatpush1.msra.mxu0 0.0
    %531 = vmatprep.subr.mxu0 0.0
    %532 = vmatpush1.msra.mxu0 0.0
    %533 = vmatprep.subr.mxu0 0.0
    %534 = vmatpush1.msra.mxu0 0.0
    %535 = vmatprep.subr.mxu0 0.0
    %536 = vmatpush1.msra.mxu0 0.0
    %537 = vmatprep.subr.mxu0 0.0
    %538 = vmatpush1.msra.mxu0 0.0
    %539 = vmatprep.subr.mxu0 0.0
    %540 = vmatpush1.msra.mxu0 %v494
    %541 = vmatprep.subr.mxu0 0.0
    %542 = vmatpush2.msra.mxu0 0.0
    %543 = vmatprep.subr.mxu0 0.0
    %544 = vmatpush2.msra.mxu0 0.0
    %545 = vmatprep.subr.mxu0 0.0
    %546 = vmatpush2.msra.mxu0 0.0
    %547 = vmatprep.subr.mxu0 0.0
    %548 = vmatpush2.msra.mxu0 0.0
    %549 = vmatprep.subr.mxu0 0.0
    %550 = vmatpush2.msra.mxu0 0.0
    %551 = vmatprep.subr.mxu0 0.0
    %552 = vmatpush2.msra.mxu0 0.0
    %553 = vmatprep.subr.mxu0 0.0
    %554 = vmatpush2.msra.mxu0 0.0
    %555 = vmatprep.subr.mxu0 0.0
    %556 = vmatpush2.msra.mxu0 0.0
    %557 = vmatprep.subr.mxu0 0.0
    %558 = vmatpush2.msra.mxu0 0.0
    %559 = vmatprep.subr.mxu0 0.0
    %560 = vmatpush2.msra.mxu0 0.0
    %561 = vmatprep.subr.mxu0 0.0
    %562 = vmatpush2.msra.mxu0 0.0
    %563 = vmatprep.subr.mxu0 0.0
    %564 = vmatpush2.msra.mxu0 0.0
    %565 = vmatprep.subr.mxu0 0.0
    %566 = vmatpush2.msra.mxu0 0.0
    %567 = vmatprep.subr.mxu0 0.0
    %568 = vmatpush2.msra.mxu0 0.0
    %569 = vmatprep.subr.mxu0 0.0
    %570 = vmatpush2.msra.mxu0 0.0
    %571 = vmatprep.subr.mxu0 0.0
    %572 = vmatpush2.msra.mxu0 0.0
    %573 = vmatprep.mubr.f32.mxu0 0.0
    %574 = vmatmul.mubr.f32.gmra.mxu0 %v504
    %v575 = vpop.f32.mrf.mxu0
    %v576 = vadd.f32 %v500, %v575
    %v577 = vpop.f32.mrf.mxu0
    %578 = vmatprep.mubr.f32.mxu0 0.0
    %579 = vmatmul.mubr.f32.gmra.mxu0 %v507
    %v580 = vpop.f32.mrf.mxu0
    %v581 = vadd.f32 %v500, %v580
    %v582 = vpop.f32.mrf.mxu0
    %583 = vdwg.mxu0
    %584 = vst [vmem:[#allocation2] sm:$0xff] %v576
    %585 = vst [vmem:[#allocation2 + $0x8] sm:$0xff] %v581
    // Predicated region
    $region30: #{tpu_custom_call.1} parent=1 // pred_check
      _
    $region31: #{tpu_custom_call.1} parent=1 // pred_check_branch
      %587 = sbr.rel (0) target = $region33
    $region32: #{tpu_custom_call.1} parent=1 // pred_region
      %s589 = ssub.s32 256, 256
      %590 = vsyncadd [#allocation3], %s589
      %s591 = sshll.u32 [#allocation2], 4
      %s592 = int_to_ptr.vmem [resolvable:$true] %s591
      %597 = dma.vmem_to_hbm [thread:$0]  %s592, 256, %s7, [#allocation3], 128, 128, 8
    $region33: #{tpu_custom_call.1} parent=1 // pred_fallthru
      _
    // Predicated region
    $region34: #{tpu_custom_call.1} parent=1 // pred_check
      _
    $region35: #{tpu_custom_call.1} parent=1 // pred_check_branch
      %599 = sbr.rel (0) target = $region37
    $region36: #{tpu_custom_call.1} parent=1 // pred_region
      %600 = dma.done [#allocation3], 256
    $region37: #{tpu_custom_call.1} parent=1 // pred_fallthru
      _
    %601 = vsyncpa [#allocation3], 1

</llo_original>
